<compile_context>
chip_gen: v7x
topology: tpu7x:2x2x1
jax: 0.10.0
libtpu: 0.0.40
codegen_flags: <defaults>
</compile_context>

<pallas_src>
import jax
import jax.numpy as jnp
from jax.experimental import pallas as pl
from jax.experimental.pallas import tpu as pltpu


def dnn_kernel(prem_ref, hyp_ref,
               w1p_ref, w1h_ref, b1_ref, w2_ref, b2_ref, wp_ref, bp_ref,
               o_ref,
               pmax_ref, hmax_ref):
    s = pl.program_id(1)
    ns = pl.num_programs(1)

    # Partial max over this sequence tile (axis=1 of the [TB, TS, E] block).
    p_tile = jnp.max(prem_ref[...], axis=1)          # [TB, E]
    h_tile = jnp.max(hyp_ref[...], axis=1)           # [TB, E]

    @pl.when(s == 0)
    def _():
        pmax_ref[...] = p_tile
        hmax_ref[...] = h_tile

    @pl.when(s > 0)
    def _():
        pmax_ref[...] = jnp.maximum(pmax_ref[...], p_tile)
        hmax_ref[...] = jnp.maximum(hmax_ref[...], h_tile)

    @pl.when(s == ns - 1)
    def _():
        # ff_layers[0]: concat-free Linear(2E -> H) + ReLU
        x = (jnp.dot(pmax_ref[...], w1p_ref[...], preferred_element_type=jnp.float32)
             + jnp.dot(hmax_ref[...], w1h_ref[...], preferred_element_type=jnp.float32)
             + b1_ref[...])
        x = jnp.maximum(x, 0.0)

        # ff_layers[1]: Linear(H -> H) + ReLU
        x = jnp.dot(x, w2_ref[...], preferred_element_type=jnp.float32) + b2_ref[...]
        x = jnp.maximum(x, 0.0)

        # layer_pred: Linear(H -> 1) + sigmoid, on VPU/XLU (multiply + lane reduce).
        z = jnp.sum(x * wp_ref[...], axis=-1, keepdims=True) + bp_ref[...]   # [TB, 1]
        sig = jax.nn.sigmoid(z)

        # Lane-dense, unmasked output store; wrapper reads column 0.
        o_ref[...] = jnp.broadcast_to(sig, o_ref.shape)


def _round_up(x, m):
    return ((x + m - 1) // m) * m


def deep_neural_network_forward(premise_ids, hypothesis_ids, params):
    """premise_ids, hypothesis_ids: [B, S] int32.  Returns [B] float32."""
    emb_table = params["embedding"]                  # [V, E]
    B, S = premise_ids.shape
    E = emb_table.shape[1]
    H = params["w1"].shape[1]

    # ---- glue: embedding gather -------------------------------------------
    # TODO(synk): fuse this gather into the kernel (scalar-prefetch ids + row DMA)
    # to halve HBM traffic; kept as jnp.take for now.
    prem = jnp.take(emb_table, premise_ids, axis=0).astype(jnp.float32)   # [B,S,E]
    hyp = jnp.take(emb_table, hypothesis_ids, axis=0).astype(jnp.float32)  # [B,S,E]

    # ---- tile sizing (fits v7x's 64 MiB VMEM; pipelined on all generations) --
    TB = min(256, _round_up(B, 8))
    B_pad = _round_up(B, TB)
    per_seq_bytes = 2 * 2 * TB * E * 4               # both inputs, double-buffered
    ts_budget = max(8, ((24 * 1024 * 1024) // per_seq_bytes) // 8 * 8)
    TS = min(_round_up(S, 8), ts_budget)
    S_pad = _round_up(S, TS)
    H_pad = _round_up(H, 128)

    # ---- input padding -----------------------------------------------------
    if B_pad > B:                                    # batch pad: zeros (rows discarded)
        prem = jnp.pad(prem, ((0, B_pad - B), (0, 0), (0, 0)))
        hyp = jnp.pad(hyp, ((0, B_pad - B), (0, 0), (0, 0)))
    if S_pad > S:                                    # seq pad: -max so max-pool is unaffected
        neg = jnp.finfo(jnp.float32).min
        prem = jnp.pad(prem, ((0, 0), (0, S_pad - S), (0, 0)), constant_values=neg)
        hyp = jnp.pad(hyp, ((0, 0), (0, S_pad - S), (0, 0)), constant_values=neg)

    # ---- weight prep: split w1 (no concat), zero-pad hidden dim to 128 ------
    w1 = params["w1"]                                # (2E, H), already (in, out)
    w1p = jnp.pad(w1[:E], ((0, 0), (0, H_pad - H)))
    w1h = jnp.pad(w1[E:], ((0, 0), (0, H_pad - H)))
    b1 = jnp.pad(params["b1"], ((0, 0), (0, H_pad - H)))
    w2 = jnp.pad(params["w2"], ((0, H_pad - H), (0, H_pad - H)))
    b2 = jnp.pad(params["b2"], ((0, 0), (0, H_pad - H)))
    wp = jnp.pad(params["wp"].reshape(1, H), ((0, 0), (0, H_pad - H)))
    bp = params["bp"].reshape(1, 1)

    num_b = B_pad // TB
    num_s = S_pad // TS

    # Explicit VMEM budget: double-buffered inputs + resident weights + scratch.
    vmem_bytes = 4 * (2 * 2 * TB * TS * E            # prem+hyp pipeline buffers
                      + 2 * TB * E                   # max accumulators
                      + 2 * (2 * E * H_pad + 3 * H_pad + H_pad * H_pad + 1)
                      + 2 * TB * 128)                # output buffers
    vmem_limit = int(min(max(2 * vmem_bytes, 16 * 1024 * 1024), 64 * 1024 * 1024))

    const2 = lambda b, s: (0, 0)

    out = pl.pallas_call(
        dnn_kernel,
        out_shape=jax.ShapeDtypeStruct((B_pad, 128), jnp.float32),
        grid_spec=pltpu.PrefetchScalarGridSpec(
            num_scalar_prefetch=0,
            grid=(num_b, num_s),
            in_specs=[
                pl.BlockSpec((TB, TS, E), lambda b, s: (b, s, 0)),   # premise emb
                pl.BlockSpec((TB, TS, E), lambda b, s: (b, s, 0)),   # hypothesis emb
                pl.BlockSpec((E, H_pad), const2),                    # w1 (premise half)
                pl.BlockSpec((E, H_pad), const2),                    # w1 (hypothesis half)
                pl.BlockSpec((1, H_pad), const2),                    # b1
                pl.BlockSpec((H_pad, H_pad), const2),                # w2
                pl.BlockSpec((1, H_pad), const2),                    # b2
                pl.BlockSpec((1, H_pad), const2),                    # wp (row)
                pl.BlockSpec((1, 1), const2),                        # bp
            ],
            out_specs=pl.BlockSpec((TB, 128), lambda b, s: (b, 0)),
            scratch_shapes=[pltpu.VMEM((TB, E), jnp.float32),
                            pltpu.VMEM((TB, E), jnp.float32)],
        ),
        compiler_params=pltpu.CompilerParams(
            dimension_semantics=("parallel", "arbitrary"),
            vmem_limit_bytes=vmem_limit,
        ),
    )(prem, hyp, w1p, w1h, b1, w2, b2, wp, bp)

    # torch.flatten(x): take the real rows, lane 0 (all lanes hold the same value).
    return out[:B, 0]


def _reference_forward(premise_ids, hypothesis_ids, params):
    """Plain-JAX reference matching the PyTorch module."""
    emb = params["embedding"]
    p = jnp.take(emb, premise_ids, axis=0)
    h = jnp.take(emb, hypothesis_ids, axis=0)
    p_max = jnp.max(p, axis=1)
    h_max = jnp.max(h, axis=1)
    x = jnp.concatenate([p_max, h_max], axis=-1)
    x = jnp.maximum(x @ params["w1"] + params["b1"], 0.0)
    x = jnp.maximum(x @ params["w2"] + params["b2"], 0.0)
    z = x @ params["wp"] + params["bp"]
    return jax.nn.sigmoid(z).reshape(-1)


def init_params(key, vocab_size, emb_dim, hidden_size):
    """Deterministic synthetic parameters (shapes mirror the nn.Module)."""
    ks = jax.random.split(key, 7)
    emb = jax.random.normal(ks[0], (vocab_size, emb_dim), jnp.float32) * 0.1
    # nn.Linear weight is [out, in]; store transposed (in, out) for x @ W.
    w1 = jax.random.normal(ks[1], (2 * emb_dim, hidden_size), jnp.float32) * 0.1
    b1 = jax.random.normal(ks[2], (1, hidden_size), jnp.float32) * 0.1
    w2 = jax.random.normal(ks[3], (hidden_size, hidden_size), jnp.float32) * 0.1
    b2 = jax.random.normal(ks[4], (1, hidden_size), jnp.float32) * 0.1
    wp = jax.random.normal(ks[5], (hidden_size, 1), jnp.float32) * 0.1
    bp = jax.random.normal(ks[6], (1, 1), jnp.float32) * 0.1
    return {"embedding": emb, "w1": w1, "b1": b1,
            "w2": w2, "b2": b2, "wp": wp, "bp": bp}


if __name__ == "__main__":
    # Small shapes consistent with the forward: batch=2, seq=8, emb=32, hidden=32
    B, S, E, H, V = 2, 8, 32, 32, 64

    key = jax.random.PRNGKey(0)
    k_params, k_prem, k_hyp = jax.random.split(key, 3)

    params = init_params(k_params, vocab_size=V, emb_dim=E, hidden_size=H)
    premise_ids = jax.random.randint(k_prem, (B, S), 0, V, dtype=jnp.int32)
    hypothesis_ids = jax.random.randint(k_hyp, (B, S), 0, V, dtype=jnp.int32)

    out = deep_neural_network_forward(premise_ids, hypothesis_ids, params)
    jax.block_until_ready(out)

    ref = _reference_forward(premise_ids, hypothesis_ids, params)
    jax.block_until_ready(ref)

    assert out.shape == (B,), out.shape
    assert bool(jnp.all((out >= 0.0) & (out <= 1.0)))
    assert bool(jnp.allclose(out, ref, rtol=1e-4, atol=1e-4)), (out, ref)
    print("KERNEL_OK")
</pallas_src>

<mosaic_0001>
module attributes {stable_mosaic.version = 11 : i64} {
  func.func @dnn_kernel(%arg0: i32, %arg1: i32, %arg2: memref<8x8x32xf32, #tpu.memory_space<vmem>>, %arg3: memref<8x8x32xf32, #tpu.memory_space<vmem>>, %arg4: memref<32x128xf32, #tpu.memory_space<vmem>>, %arg5: memref<32x128xf32, #tpu.memory_space<vmem>>, %arg6: memref<1x128xf32, #tpu.memory_space<vmem>>, %arg7: memref<128x128xf32, #tpu.memory_space<vmem>>, %arg8: memref<1x128xf32, #tpu.memory_space<vmem>>, %arg9: memref<1x128xf32, #tpu.memory_space<vmem>>, %arg10: memref<1x1xf32, #tpu.memory_space<vmem>>, %arg11: memref<8x128xf32, #tpu.memory_space<vmem>>, %arg12: memref<8x32xf32, #tpu.memory_space<vmem>>, %arg13: memref<8x32xf32, #tpu.memory_space<vmem>>) attributes {dimension_semantics = [#tpu.dimension_semantics<parallel>, #tpu.dimension_semantics<arbitrary>], iteration_bounds = array<i64: 1, 1>, scalar_prefetch = 0 : i64, scratch_operands = 2 : i64, tpu.core_type = #tpu.core_type<tc>, window_params = [{transform_indices = @transform_0, window_bounds = array<i64: 8, 8, 32>}, {transform_indices = @transform_1, window_bounds = array<i64: 8, 8, 32>}, {pipeline_mode = #tpu.pipeline_mode<synchronous>, transform_indices = @transform_2, window_bounds = array<i64: 32, 128>}, {pipeline_mode = #tpu.pipeline_mode<synchronous>, transform_indices = @transform_3, window_bounds = array<i64: 32, 128>}, {pipeline_mode = #tpu.pipeline_mode<synchronous>, transform_indices = @transform_4, window_bounds = array<i64: 1, 128>}, {pipeline_mode = #tpu.pipeline_mode<synchronous>, transform_indices = @transform_5, window_bounds = array<i64: 128, 128>}, {pipeline_mode = #tpu.pipeline_mode<synchronous>, transform_indices = @transform_6, window_bounds = array<i64: 1, 128>}, {pipeline_mode = #tpu.pipeline_mode<synchronous>, transform_indices = @transform_7, window_bounds = array<i64: 1, 128>}, {pipeline_mode = #tpu.pipeline_mode<synchronous>, transform_indices = @transform_8, window_bounds = array<i64: 1, 1>}, {transform_indices = @transform_9, window_bounds = array<i64: 8, 128>}]} {
    %c0 = arith.constant 0 : index
    %c0_0 = arith.constant 0 : index
    %c0_1 = arith.constant 0 : index
    %0 = vector.load %arg2[%c0, %c0_0, %c0_1] : memref<8x8x32xf32, #tpu.memory_space<vmem>>, vector<8x8x32xf32>
    %cst = arith.constant dense<0xFF800000> : vector<8x32xf32>
    %1 = vector.multi_reduction <maximumf>, %0, %cst [1] : vector<8x8x32xf32> to vector<8x32xf32>
    %c0_2 = arith.constant 0 : index
    %c0_3 = arith.constant 0 : index
    %c0_4 = arith.constant 0 : index
    %2 = vector.load %arg3[%c0_2, %c0_3, %c0_4] : memref<8x8x32xf32, #tpu.memory_space<vmem>>, vector<8x8x32xf32>
    %cst_5 = arith.constant dense<0xFF800000> : vector<8x32xf32>
    %3 = vector.multi_reduction <maximumf>, %2, %cst_5 [1] : vector<8x8x32xf32> to vector<8x32xf32>
    %c0_i32 = arith.constant 0 : i32
    %4 = arith.cmpi eq, %arg1, %c0_i32 : i32
    %5 = arith.extui %4 : i1 to i32
    %c0_i32_6 = arith.constant 0 : i32
    %6 = arith.cmpi ne, %5, %c0_i32_6 : i32
    scf.if %6 {
      %c0_11 = arith.constant 0 : index
      %c0_12 = arith.constant 0 : index
      %13 = vector.load %arg12[%c0_11, %c0_12] : memref<8x32xf32, #tpu.memory_space<vmem>>, vector<8x32xf32>
      tpu.vector_store %arg12[%c0_11, %c0_12], %1 {strides = array<i32>} : memref<8x32xf32, #tpu.memory_space<vmem>>, vector<8x32xf32>,
      %c0_13 = arith.constant 0 : index
      %c0_14 = arith.constant 0 : index
      %14 = vector.load %arg13[%c0_13, %c0_14] : memref<8x32xf32, #tpu.memory_space<vmem>>, vector<8x32xf32>
      tpu.vector_store %arg13[%c0_13, %c0_14], %3 {strides = array<i32>} : memref<8x32xf32, #tpu.memory_space<vmem>>, vector<8x32xf32>,
    } else {
    }
    %c0_i32_7 = arith.constant 0 : i32
    %7 = arith.cmpi sgt, %arg1, %c0_i32_7 : i32
    %8 = arith.extui %7 : i1 to i32
    %c0_i32_8 = arith.constant 0 : i32
    %9 = arith.cmpi ne, %8, %c0_i32_8 : i32
    scf.if %9 {
      %c0_11 = arith.constant 0 : index
      %c0_12 = arith.constant 0 : index
      %13 = vector.load %arg12[%c0_11, %c0_12] : memref<8x32xf32, #tpu.memory_space<vmem>>, vector<8x32xf32>
      %14 = arith.maximumf %13, %1 : vector<8x32xf32>
      %c0_13 = arith.constant 0 : index
      %c0_14 = arith.constant 0 : index
      %15 = vector.load %arg12[%c0_13, %c0_14] : memref<8x32xf32, #tpu.memory_space<vmem>>, vector<8x32xf32>
      tpu.vector_store %arg12[%c0_13, %c0_14], %14 {strides = array<i32>} : memref<8x32xf32, #tpu.memory_space<vmem>>, vector<8x32xf32>,
      %c0_15 = arith.constant 0 : index
      %c0_16 = arith.constant 0 : index
      %16 = vector.load %arg13[%c0_15, %c0_16] : memref<8x32xf32, #tpu.memory_space<vmem>>, vector<8x32xf32>
      %17 = arith.maximumf %16, %3 : vector<8x32xf32>
      %c0_17 = arith.constant 0 : index
      %c0_18 = arith.constant 0 : index
      %18 = vector.load %arg13[%c0_17, %c0_18] : memref<8x32xf32, #tpu.memory_space<vmem>>, vector<8x32xf32>
      tpu.vector_store %arg13[%c0_17, %c0_18], %17 {strides = array<i32>} : memref<8x32xf32, #tpu.memory_space<vmem>>, vector<8x32xf32>,
    } else {
    }
    %c0_i32_9 = arith.constant 0 : i32
    %10 = arith.cmpi eq, %arg1, %c0_i32_9 : i32
    %11 = arith.extui %10 : i1 to i32
    %c0_i32_10 = arith.constant 0 : i32
    %12 = arith.cmpi ne, %11, %c0_i32_10 : i32
    scf.if %12 {
      %c0_11 = arith.constant 0 : index
      %c0_12 = arith.constant 0 : index
      %13 = vector.load %arg12[%c0_11, %c0_12] : memref<8x32xf32, #tpu.memory_space<vmem>>, vector<8x32xf32>
      %c0_13 = arith.constant 0 : index
      %c0_14 = arith.constant 0 : index
      %14 = vector.load %arg4[%c0_13, %c0_14] : memref<32x128xf32, #tpu.memory_space<vmem>>, vector<32x128xf32>
      %cst_15 = arith.constant dense<0.000000e+00> : vector<8x128xf32>
      %15 = tpu.matmul %13, %14, %cst_15 {dimension_numbers = #tpu.dot_dimension_numbers<[1], [0], [0], [1], [0, 0, 1, 1], [], []>} : vector<8x32xf32>, vector<32x128xf32>, vector<8x128xf32> -> vector<8x128xf32>
      %c0_16 = arith.constant 0 : index
      %c0_17 = arith.constant 0 : index
      %16 = vector.load %arg13[%c0_16, %c0_17] : memref<8x32xf32, #tpu.memory_space<vmem>>, vector<8x32xf32>
      %c0_18 = arith.constant 0 : index
      %c0_19 = arith.constant 0 : index
      %17 = vector.load %arg5[%c0_18, %c0_19] : memref<32x128xf32, #tpu.memory_space<vmem>>, vector<32x128xf32>
      %cst_20 = arith.constant dense<0.000000e+00> : vector<8x128xf32>
      %18 = tpu.matmul %16, %17, %cst_20 {dimension_numbers = #tpu.dot_dimension_numbers<[1], [0], [0], [1], [0, 0, 1, 1], [], []>} : vector<8x32xf32>, vector<32x128xf32>, vector<8x128xf32> -> vector<8x128xf32>
      %19 = arith.addf %15, %18 : vector<8x128xf32>
      %c0_21 = arith.constant 0 : index
      %c0_22 = arith.constant 0 : index
      %20 = vector.load %arg6[%c0_21, %c0_22] : memref<1x128xf32, #tpu.memory_space<vmem>>, vector<1x128xf32>
      %21 = vector.broadcast %20 : vector<1x128xf32> to vector<8x128xf32>
      %22 = arith.addf %19, %21 : vector<8x128xf32>
      %cst_23 = arith.constant 0.000000e+00 : f32
      %23 = vector.broadcast %cst_23 : f32 to vector<8x128xf32>
      %24 = arith.maximumf %22, %23 : vector<8x128xf32>
      %c0_24 = arith.constant 0 : index
      %c0_25 = arith.constant 0 : index
      %25 = vector.load %arg7[%c0_24, %c0_25] : memref<128x128xf32, #tpu.memory_space<vmem>>, vector<128x128xf32>
      %cst_26 = arith.constant dense<0.000000e+00> : vector<8x128xf32>
      %26 = tpu.matmul %24, %25, %cst_26 {dimension_numbers = #tpu.dot_dimension_numbers<[1], [0], [0], [1], [0, 0, 1, 1], [], []>} : vector<8x128xf32>, vector<128x128xf32>, vector<8x128xf32> -> vector<8x128xf32>
      %c0_27 = arith.constant 0 : index
      %c0_28 = arith.constant 0 : index
      %27 = vector.load %arg8[%c0_27, %c0_28] : memref<1x128xf32, #tpu.memory_space<vmem>>, vector<1x128xf32>
      %28 = vector.broadcast %27 : vector<1x128xf32> to vector<8x128xf32>
      %29 = arith.addf %26, %28 : vector<8x128xf32>
      %cst_29 = arith.constant 0.000000e+00 : f32
      %30 = vector.broadcast %cst_29 : f32 to vector<8x128xf32>
      %31 = arith.maximumf %29, %30 : vector<8x128xf32>
      %c0_30 = arith.constant 0 : index
      %c0_31 = arith.constant 0 : index
      %32 = vector.load %arg9[%c0_30, %c0_31] : memref<1x128xf32, #tpu.memory_space<vmem>>, vector<1x128xf32>
      %33 = vector.broadcast %32 : vector<1x128xf32> to vector<8x128xf32>
      %34 = arith.mulf %31, %33 : vector<8x128xf32>
      %cst_32 = arith.constant dense<0.000000e+00> : vector<8xf32>
      %35 = vector.multi_reduction <add>, %34, %cst_32 [1] : vector<8x128xf32> to vector<8xf32>
      %36 = vector.shape_cast %35 : vector<8xf32> to vector<8x1xf32>
      %c0_33 = arith.constant 0 : index
      %c0_34 = arith.constant 0 : index
      %37 = vector.load %arg10[%c0_33, %c0_34] : memref<1x1xf32, #tpu.memory_space<vmem>>, vector<1x1xf32>
      %38 = vector.broadcast %37 : vector<1x1xf32> to vector<8x1xf32>
      %39 = arith.addf %36, %38 : vector<8x1xf32>
      %40 = arith.negf %39 : vector<8x1xf32>
      %41 = math.exp %40 : vector<8x1xf32>
      %cst_35 = arith.constant 1.000000e+00 : f32
      %42 = vector.broadcast %cst_35 : f32 to vector<8x1xf32>
      %43 = arith.addf %42, %41 : vector<8x1xf32>
      %44 = arith.divf %42, %43 : vector<8x1xf32>
      %45 = vector.shape_cast %44 : vector<8x1xf32> to vector<8x1xf32>
      %46 = vector.broadcast %45 : vector<8x1xf32> to vector<8x128xf32>
      %c0_36 = arith.constant 0 : index
      %c0_37 = arith.constant 0 : index
      %47 = vector.load %arg11[%c0_36, %c0_37] : memref<8x128xf32, #tpu.memory_space<vmem>>, vector<8x128xf32>
      tpu.vector_store %arg11[%c0_36, %c0_37], %46 {strides = array<i32>} : memref<8x128xf32, #tpu.memory_space<vmem>>, vector<8x128xf32>,
    } else {
    }
    return
  }
  func.func @transform_0(%arg0: i32, %arg1: i32) -> (i32, i32, i32) {
    %c0_i32 = arith.constant 0 : i32
    %c0_i32_0 = arith.constant 0 : i32
    return %arg0, %arg1, %c0_i32 : i32, i32, i32
  }
  func.func @transform_1(%arg0: i32, %arg1: i32) -> (i32, i32, i32) {
    %c0_i32 = arith.constant 0 : i32
    %c0_i32_0 = arith.constant 0 : i32
    return %arg0, %arg1, %c0_i32 : i32, i32, i32
  }
  func.func @transform_2(%arg0: i32, %arg1: i32) -> (i32, i32) {
    %c0_i32 = arith.constant 0 : i32
    %c0_i32_0 = arith.constant 0 : i32
    %c0_i32_1 = arith.constant 0 : i32
    return %c0_i32, %c0_i32_0 : i32, i32
  }
  func.func @transform_3(%arg0: i32, %arg1: i32) -> (i32, i32) {
    %c0_i32 = arith.constant 0 : i32
    %c0_i32_0 = arith.constant 0 : i32
    %c0_i32_1 = arith.constant 0 : i32
    return %c0_i32, %c0_i32_0 : i32, i32
  }
  func.func @transform_4(%arg0: i32, %arg1: i32) -> (i32, i32) {
    %c0_i32 = arith.constant 0 : i32
    %c0_i32_0 = arith.constant 0 : i32
    %c0_i32_1 = arith.constant 0 : i32
    return %c0_i32, %c0_i32_0 : i32, i32
  }
  func.func @transform_5(%arg0: i32, %arg1: i32) -> (i32, i32) {
    %c0_i32 = arith.constant 0 : i32
    %c0_i32_0 = arith.constant 0 : i32
    %c0_i32_1 = arith.constant 0 : i32
    return %c0_i32, %c0_i32_0 : i32, i32
  }
  func.func @transform_6(%arg0: i32, %arg1: i32) -> (i32, i32) {
    %c0_i32 = arith.constant 0 : i32
    %c0_i32_0 = arith.constant 0 : i32
    %c0_i32_1 = arith.constant 0 : i32
    return %c0_i32, %c0_i32_0 : i32, i32
  }
  func.func @transform_7(%arg0: i32, %arg1: i32) -> (i32, i32) {
    %c0_i32 = arith.constant 0 : i32
    %c0_i32_0 = arith.constant 0 : i32
    %c0_i32_1 = arith.constant 0 : i32
    return %c0_i32, %c0_i32_0 : i32, i32
  }
  func.func @transform_8(%arg0: i32, %arg1: i32) -> (i32, i32) {
    %c0_i32 = arith.constant 0 : i32
    %c0_i32_0 = arith.constant 0 : i32
    %c0_i32_1 = arith.constant 0 : i32
    return %c0_i32, %c0_i32_0 : i32, i32
  }
  func.func @transform_9(%arg0: i32, %arg1: i32) -> (i32, i32) {
    %c0_i32 = arith.constant 0 : i32
    %c0_i32_0 = arith.constant 0 : i32
    return %arg0, %c0_i32 : i32, i32
  }
}

</mosaic_0001>

<llo_original>
// kernel: tpu_custom_call.1
$region0: #{tpu_custom_call.1}
  #allocation0 [shape = 'u32[]', space=smem, size = 0x4, offset = 0x4, fixed_abs, tag = 'smem constant byte address 0x4 - core index']
  #allocation1 [shape = 'u32[144,128]{1,0:T(1,128)}', space=vmem, size = 0x12000, scoped, tag = 'internal scratch']
  #allocation2 [shape = 'f32[8,32]{1,0:T(8,128)}', space=vmem, size = 0x1000, scoped, tag = 'scratch operand']
  #allocation3 [shape = 'f32[8,32]{1,0:T(8,128)}', space=vmem, size = 0x1000, scoped, tag = 'scratch operand']
  #allocation4 [shape = 'f32[1,1]{1,0:T(1,128)S(1)}', space=vmem, size = 0x200, scoped, tag = 'scoped memory for tpu_custom_call.1']
  %s0 = inlined_call_operand.hbm [shape: f32[8,8,32], index: 0, kind: input, shape index: {}]
  %s1 = inlined_call_operand.hbm [shape: f32[8,8,32], index: 1, kind: input, shape index: {}]
  %s2 = inlined_call_operand.hbm [shape: f32[32,128], index: 2, kind: input, shape index: {}]
  %s3 = inlined_call_operand.hbm [shape: f32[32,128], index: 3, kind: input, shape index: {}]
  %s4 = inlined_call_operand.vmem [shape: f32[1,128], index: 4, kind: input, shape index: {}]
  %s5 = inlined_call_operand.hbm [shape: f32[128,128], index: 5, kind: input, shape index: {}]
  %s6 = inlined_call_operand.vmem [shape: f32[1,128], index: 6, kind: input, shape index: {}]
  %s7 = inlined_call_operand.vmem [shape: f32[1,128], index: 7, kind: input, shape index: {}]
  %s8 = inlined_call_operand.<no memory space> [shape: f32[1,1], index: 8, kind: input, shape index: {}]
  %s9 = inlined_call_operand.hbm [shape: f32[8,128], index: 9, kind: output, shape index: {}]
  %s10 = sld [smem:[#allocation0]]
  $region78: #{tpu_custom_call.1} parent=0
    _
  %s12 = ssub.s32 1, %s10
  %s13 = scalar_select 0, %s12, %s10
  %v14 = vstv %s8
  %15 = vst [vmem:[#allocation4] sm:$0x1] %v14
  $region1: #{tpu_custom_call.1} parent=0
    #allocation5 [shape = 'u8[32768]{0}', space=vmem, size = 0x8000, scoped, tag = 'input window, operand 0, single buffered']
    #allocation6 [shape = 's32[1]{0}', space=sflag, size = 0x4, scoped, tag = 'scoped memory for tpu_custom_call.1']
    #allocation7 [shape = 's32[1]{0}', space=sflag, size = 0x4, scoped, tag = 'scoped memory for tpu_custom_call.1']
    #allocation8 [shape = 'u8[32768]{0}', space=vmem, size = 0x8000, scoped, tag = 'input window, operand 1, single buffered']
    #allocation9 [shape = 's32[1]{0}', space=sflag, size = 0x4, scoped, tag = 'scoped memory for tpu_custom_call.1']
    #allocation10 [shape = 'u8[16384]{0}', space=vmem, size = 0x4000, scoped, tag = 'input window, operand 2, single buffered']
    #allocation11 [shape = 'u8[16384]{0}', space=vmem, size = 0x4000, scoped, tag = 'input window, operand 3, single buffered']
    #allocation12 [shape = 's32[1]{0}', space=sflag, size = 0x4, scoped, tag = 'scoped memory for tpu_custom_call.1']
    #allocation13 [shape = 'u8[65536]{0}', space=vmem, size = 0x10000, scoped, tag = 'input window, operand 5, single buffered']
    #allocation14 [shape = 'u8[4096]{0}', space=vmem, size = 0x1000, scoped, tag = 'output window, operand 0, single buffered']
    %16 = vsyncpa [#allocation6], 0
    %17 = vsyncpa [#allocation9], 0
    %18 = vsyncpa [#allocation12], 0
    %19 = vsyncpa [#allocation7], 0
    // Predicated region
    $region2: #{tpu_custom_call.1} parent=1 // pred_check
      _
    $region3: #{tpu_custom_call.1} parent=1 // pred_check_branch
      %21 = sbr.rel (0) target = $region5
    $region4: #{tpu_custom_call.1} parent=1 // pred_region
      %s23 = ssub.s32 1024, 1024
      %24 = vsyncadd [#allocation6], %s23
      %s25 = sshll.u32 [#allocation5], 4
      %s26 = int_to_ptr.vmem [resolvable:$true] %s25
      %31 = dma.hbm_to_vmem [thread:$0]  %s0, 1024, %s26, [#allocation6], 128, 128, 8
    $region5: #{tpu_custom_call.1} parent=1 // pred_fallthru
      _
    // Predicated region
    $region6: #{tpu_custom_call.1} parent=1 // pred_check
      _
    $region7: #{tpu_custom_call.1} parent=1 // pred_check_branch
      %33 = sbr.rel (0) target = $region9
    $region8: #{tpu_custom_call.1} parent=1 // pred_region
      %s35 = ssub.s32 1024, 1024
      %36 = vsyncadd [#allocation9], %s35
      %s37 = sshll.u32 [#allocation8], 4
      %s38 = int_to_ptr.vmem [resolvable:$true] %s37
      %43 = dma.hbm_to_vmem [thread:$0]  %s1, 1024, %s38, [#allocation9], 128, 128, 8
    $region9: #{tpu_custom_call.1} parent=1 // pred_fallthru
      _
    // Predicated region
    $region10: #{tpu_custom_call.1} parent=1 // pred_check
      _
    $region11: #{tpu_custom_call.1} parent=1 // pred_check_branch
      %45 = sbr.rel (0) target = $region13
    $region12: #{tpu_custom_call.1} parent=1 // pred_region
      %s47 = ssub.s32 512, 512
      %48 = vsyncadd [#allocation9], %s47
      %s49 = sshll.u32 [#allocation10], 4
      %s50 = int_to_ptr.vmem [resolvable:$true] %s49
      %55 = dma.hbm_to_vmem [thread:$0]  %s2, 512, %s50, [#allocation9], 128, 128, 8
    $region13: #{tpu_custom_call.1} parent=1 // pred_fallthru
      _
    // Predicated region
    $region14: #{tpu_custom_call.1} parent=1 // pred_check
      _
    $region15: #{tpu_custom_call.1} parent=1 // pred_check_branch
      %57 = sbr.rel (0) target = $region17
    $region16: #{tpu_custom_call.1} parent=1 // pred_region
      %s59 = ssub.s32 512, 512
      %60 = vsyncadd [#allocation12], %s59
      %s61 = sshll.u32 [#allocation11], 4
      %s62 = int_to_ptr.vmem [resolvable:$true] %s61
      %67 = dma.hbm_to_vmem [thread:$0]  %s3, 512, %s62, [#allocation12], 128, 128, 8
    $region17: #{tpu_custom_call.1} parent=1 // pred_fallthru
      _
    // Predicated region
    $region18: #{tpu_custom_call.1} parent=1 // pred_check
      _
    $region19: #{tpu_custom_call.1} parent=1 // pred_check_branch
      %69 = sbr.rel (0) target = $region21
    $region20: #{tpu_custom_call.1} parent=1 // pred_region
      _
    $region21: #{tpu_custom_call.1} parent=1 // pred_fallthru
      _
    // Predicated region
    $region22: #{tpu_custom_call.1} parent=1 // pred_check
      _
    $region23: #{tpu_custom_call.1} parent=1 // pred_check_branch
      %71 = sbr.rel (0) target = $region25
    $region24: #{tpu_custom_call.1} parent=1 // pred_region
      %s73 = ssub.s32 2048, 2048
      %74 = vsyncadd [#allocation12], %s73
      %s75 = sshll.u32 [#allocation13], 4
      %s76 = int_to_ptr.vmem [resolvable:$true] %s75
      %81 = dma.hbm_to_vmem [thread:$0]  %s5, 2048, %s76, [#allocation12], 128, 128, 8
    $region25: #{tpu_custom_call.1} parent=1 // pred_fallthru
      _
    // Predicated region
    $region26: #{tpu_custom_call.1} parent=1 // pred_check
      _
    $region27: #{tpu_custom_call.1} parent=1 // pred_check_branch
      %83 = sbr.rel (0) target = $region29
    $region28: #{tpu_custom_call.1} parent=1 // pred_region
      _
    $region29: #{tpu_custom_call.1} parent=1 // pred_fallthru
      _
    // Predicated region
    $region30: #{tpu_custom_call.1} parent=1 // pred_check
      _
    $region31: #{tpu_custom_call.1} parent=1 // pred_check_branch
      %85 = sbr.rel (0) target = $region33
    $region32: #{tpu_custom_call.1} parent=1 // pred_region
      _
    $region33: #{tpu_custom_call.1} parent=1 // pred_fallthru
      _
    // Predicated region
    $region34: #{tpu_custom_call.1} parent=1 // pred_check
      _
    $region35: #{tpu_custom_call.1} parent=1 // pred_check_branch
      %87 = sbr.rel (0) target = $region37
    $region36: #{tpu_custom_call.1} parent=1 // pred_region
      _
    $region37: #{tpu_custom_call.1} parent=1 // pred_fallthru
      _
    // Predicated region
    $region38: #{tpu_custom_call.1} parent=1 // pred_check
      _
    $region39: #{tpu_custom_call.1} parent=1 // pred_check_branch
      %89 = sbr.rel (0) target = $region41
    $region40: #{tpu_custom_call.1} parent=1 // pred_region
      %90 = dma.done [#allocation6], 1024
    $region41: #{tpu_custom_call.1} parent=1 // pred_fallthru
      _
    // Predicated region
    $region42: #{tpu_custom_call.1} parent=1 // pred_check
      _
    $region43: #{tpu_custom_call.1} parent=1 // pred_check_branch
      %92 = sbr.rel (0) target = $region45
    $region44: #{tpu_custom_call.1} parent=1 // pred_region
      %93 = dma.done [#allocation9], 1024
    $region45: #{tpu_custom_call.1} parent=1 // pred_fallthru
      _
    // Predicated region
    $region46: #{tpu_custom_call.1} parent=1 // pred_check
      _
    $region47: #{tpu_custom_call.1} parent=1 // pred_check_branch
      %95 = sbr.rel (0) target = $region49
    $region48: #{tpu_custom_call.1} parent=1 // pred_region
      %96 = dma.done [#allocation9], 512
    $region49: #{tpu_custom_call.1} parent=1 // pred_fallthru
      _
    // Predicated region
    $region50: #{tpu_custom_call.1} parent=1 // pred_check
      _
    $region51: #{tpu_custom_call.1} parent=1 // pred_check_branch
      %98 = sbr.rel (0) target = $region53
    $region52: #{tpu_custom_call.1} parent=1 // pred_region
      %99 = dma.done [#allocation12], 512
    $region53: #{tpu_custom_call.1} parent=1 // pred_fallthru
      _
    // Predicated region
    $region54: #{tpu_custom_call.1} parent=1 // pred_check
      _
    $region55: #{tpu_custom_call.1} parent=1 // pred_check_branch
      %101 = sbr.rel (0) target = $region57
    $region56: #{tpu_custom_call.1} parent=1 // pred_region
      %102 = dma.done [#allocation12], 2048
    $region57: #{tpu_custom_call.1} parent=1 // pred_fallthru
      _
    %v103 = vld [vmem:[#allocation5] sm:$0xff]
    %v104 = vld [vmem:[#allocation5 + $0x8] sm:$0xff]
    %v105 = vld [vmem:[#allocation5 + $0x10] sm:$0xff]
    %v106 = vld [vmem:[#allocation5 + $0x18] sm:$0xff]
    %v107 = vld [vmem:[#allocation5 + $0x20] sm:$0xff]
    %v108 = vld [vmem:[#allocation5 + $0x28] sm:$0xff]
    %v109 = vld [vmem:[#allocation5 + $0x30] sm:$0xff]
    %v110 = vld [vmem:[#allocation5 + $0x38] sm:$0xff]
    %vm111 = vcmask 261120
    %v112 = vsel %vm111, %v103, -inf
    %v113 = vrot.slane %v112, 4
    %v114 = vmax.f32 %v112, %v113
    %v115 = vrot.slane %v114, 2
    %v116 = vmax.f32 %v114, %v115
    %v117 = vrot.slane %v116, 1
    %v118 = vmax.f32 %v116, %v117
    %v119 = vsel %vm111, %v104, -inf
    %v120 = vrot.slane %v119, 4
    %v121 = vmax.f32 %v119, %v120
    %v122 = vrot.slane %v121, 2
    %v123 = vmax.f32 %v121, %v122
    %v124 = vrot.slane %v123, 1
    %v125 = vmax.f32 %v123, %v124
    %v126 = vsel %vm111, %v105, -inf
    %v127 = vrot.slane %v126, 4
    %v128 = vmax.f32 %v126, %v127
    %v129 = vrot.slane %v128, 2
    %v130 = vmax.f32 %v128, %v129
    %v131 = vrot.slane %v130, 1
    %v132 = vmax.f32 %v130, %v131
    %v133 = vsel %vm111, %v106, -inf
    %v134 = vrot.slane %v133, 4
    %v135 = vmax.f32 %v133, %v134
    %v136 = vrot.slane %v135, 2
    %v137 = vmax.f32 %v135, %v136
    %v138 = vrot.slane %v137, 1
    %v139 = vmax.f32 %v137, %v138
    %v140 = vsel %vm111, %v107, -inf
    %v141 = vrot.slane %v140, 4
    %v142 = vmax.f32 %v140, %v141
    %v143 = vrot.slane %v142, 2
    %v144 = vmax.f32 %v142, %v143
    %v145 = vrot.slane %v144, 1
    %v146 = vmax.f32 %v144, %v145
    %v147 = vsel %vm111, %v108, -inf
    %v148 = vrot.slane %v147, 4
    %v149 = vmax.f32 %v147, %v148
    %v150 = vrot.slane %v149, 2
    %v151 = vmax.f32 %v149, %v150
    %v152 = vrot.slane %v151, 1
    %v153 = vmax.f32 %v151, %v152
    %v154 = vsel %vm111, %v109, -inf
    %v155 = vrot.slane %v154, 4
    %v156 = vmax.f32 %v154, %v155
    %v157 = vrot.slane %v156, 2
    %v158 = vmax.f32 %v156, %v157
    %v159 = vrot.slane %v158, 1
    %v160 = vmax.f32 %v158, %v159
    %v161 = vsel %vm111, %v110, -inf
    %v162 = vrot.slane %v161, 4
    %v163 = vmax.f32 %v161, %v162
    %v164 = vrot.slane %v163, 2
    %v165 = vmax.f32 %v163, %v164
    %v166 = vrot.slane %v165, 1
    %v167 = vmax.f32 %v165, %v166
    %v168 = vld [vmem:[#allocation8] sm:$0xff]
    %v169 = vld [vmem:[#allocation8 + $0x8] sm:$0xff]
    %v170 = vld [vmem:[#allocation8 + $0x10] sm:$0xff]
    %v171 = vld [vmem:[#allocation8 + $0x18] sm:$0xff]
    %v172 = vld [vmem:[#allocation8 + $0x20] sm:$0xff]
    %v173 = vld [vmem:[#allocation8 + $0x28] sm:$0xff]
    %v174 = vld [vmem:[#allocation8 + $0x30] sm:$0xff]
    %v175 = vld [vmem:[#allocation8 + $0x38] sm:$0xff]
    %v176 = vsel %vm111, %v168, -inf
    %v177 = vrot.slane %v176, 4
    %v178 = vmax.f32 %v176, %v177
    %v179 = vrot.slane %v178, 2
    %v180 = vmax.f32 %v178, %v179
    %v181 = vrot.slane %v180, 1
    %v182 = vmax.f32 %v180, %v181
    %v183 = vsel %vm111, %v169, -inf
    %v184 = vrot.slane %v183, 4
    %v185 = vmax.f32 %v183, %v184
    %v186 = vrot.slane %v185, 2
    %v187 = vmax.f32 %v185, %v186
    %v188 = vrot.slane %v187, 1
    %v189 = vmax.f32 %v187, %v188
    %v190 = vsel %vm111, %v170, -inf
    %v191 = vrot.slane %v190, 4
    %v192 = vmax.f32 %v190, %v191
    %v193 = vrot.slane %v192, 2
    %v194 = vmax.f32 %v192, %v193
    %v195 = vrot.slane %v194, 1
    %v196 = vmax.f32 %v194, %v195
    %v197 = vsel %vm111, %v171, -inf
    %v198 = vrot.slane %v197, 4
    %v199 = vmax.f32 %v197, %v198
    %v200 = vrot.slane %v199, 2
    %v201 = vmax.f32 %v199, %v200
    %v202 = vrot.slane %v201, 1
    %v203 = vmax.f32 %v201, %v202
    %v204 = vsel %vm111, %v172, -inf
    %v205 = vrot.slane %v204, 4
    %v206 = vmax.f32 %v204, %v205
    %v207 = vrot.slane %v206, 2
    %v208 = vmax.f32 %v206, %v207
    %v209 = vrot.slane %v208, 1
    %v210 = vmax.f32 %v208, %v209
    %v211 = vsel %vm111, %v173, -inf
    %v212 = vrot.slane %v211, 4
    %v213 = vmax.f32 %v211, %v212
    %v214 = vrot.slane %v213, 2
    %v215 = vmax.f32 %v213, %v214
    %v216 = vrot.slane %v215, 1
    %v217 = vmax.f32 %v215, %v216
    %v218 = vsel %vm111, %v174, -inf
    %v219 = vrot.slane %v218, 4
    %v220 = vmax.f32 %v218, %v219
    %v221 = vrot.slane %v220, 2
    %v222 = vmax.f32 %v220, %v221
    %v223 = vrot.slane %v222, 1
    %v224 = vmax.f32 %v222, %v223
    %v225 = vsel %vm111, %v175, -inf
    %v226 = vrot.slane %v225, 4
    %v227 = vmax.f32 %v225, %v226
    %v228 = vrot.slane %v227, 2
    %v229 = vmax.f32 %v227, %v228
    %v230 = vrot.slane %v229, 1
    %v231 = vmax.f32 %v229, %v230
    %p232 = scmp.eq.s32.totalorder 0, 0
    // Predicated region
    $region58: #{tpu_custom_call.1} parent=1 // pred_check
      %p233 = pneg %p232
    $region59: #{tpu_custom_call.1} parent=1 // pred_check_branch
      %235 = sbr.rel (%p233) target = $region61
    $region60: #{tpu_custom_call.1} parent=1 // pred_region
      %vm244 = vcmask 1041409
      %v245 = vsel %vm244, %v125, %v118
      %vm246 = vcmask 1042434
      %v247 = vsel %vm246, %v132, %v245
      %vm248 = vcmask 1043459
      %v249 = vsel %vm248, %v139, %v247
      %vm250 = vcmask 1044484
      %v251 = vsel %vm250, %v146, %v249
      %vm252 = vcmask 1045509
      %v253 = vsel %vm252, %v153, %v251
      %vm254 = vcmask 1046534
      %v255 = vsel %vm254, %v160, %v253
      %vm256 = vcmask 1047559
      %v257 = vsel %vm256, %v167, %v255
      %259 = vst.msk [vmem:[#allocation2] sm:$0xff] %vm111, %v257
      %v268 = vsel %vm244, %v189, %v182
      %v269 = vsel %vm246, %v196, %v268
      %v270 = vsel %vm248, %v203, %v269
      %v271 = vsel %vm250, %v210, %v270
      %v272 = vsel %vm252, %v217, %v271
      %v273 = vsel %vm254, %v224, %v272
      %v274 = vsel %vm256, %v231, %v273
      %276 = vst.msk [vmem:[#allocation3] sm:$0xff] %vm111, %v274
    $region61: #{tpu_custom_call.1} parent=1 // pred_fallthru
      _
    %p277 = scmp.gt.s32.totalorder 0, 0
    // Predicated region
    $region62: #{tpu_custom_call.1} parent=1 // pred_check
      %p278 = pneg %p277
    $region63: #{tpu_custom_call.1} parent=1 // pred_check_branch
      %280 = sbr.rel (%p278) target = $region65
    $region64: #{tpu_custom_call.1} parent=1 // pred_region
      %v281 = vld [vmem:[#allocation2] sm:$0xff]
      %vm290 = vcmask 1041409
      %v291 = vsel %vm290, %v125, %v118
      %vm292 = vcmask 1042434
      %v293 = vsel %vm292, %v132, %v291
      %vm294 = vcmask 1043459
      %v295 = vsel %vm294, %v139, %v293
      %vm296 = vcmask 1044484
      %v297 = vsel %vm296, %v146, %v295
      %vm298 = vcmask 1045509
      %v299 = vsel %vm298, %v153, %v297
      %vm300 = vcmask 1046534
      %v301 = vsel %vm300, %v160, %v299
      %vm302 = vcmask 1047559
      %v303 = vsel %vm302, %v167, %v301
      %v305 = vmax.f32 %v281, %v303
      %306 = vst.msk [vmem:[#allocation2] sm:$0xff] %vm111, %v305
      %v307 = vld [vmem:[#allocation3] sm:$0xff]
      %v316 = vsel %vm290, %v189, %v182
      %v317 = vsel %vm292, %v196, %v316
      %v318 = vsel %vm294, %v203, %v317
      %v319 = vsel %vm296, %v210, %v318
      %v320 = vsel %vm298, %v217, %v319
      %v321 = vsel %vm300, %v224, %v320
      %v322 = vsel %vm302, %v231, %v321
      %v324 = vmax.f32 %v307, %v322
      %325 = vst.msk [vmem:[#allocation3] sm:$0xff] %vm111, %v324
    $region65: #{tpu_custom_call.1} parent=1 // pred_fallthru
      _
    // Predicated region
    $region66: #{tpu_custom_call.1} parent=1 // pred_check
      %p326 = pneg %p232
    $region67: #{tpu_custom_call.1} parent=1 // pred_check_branch
      %328 = sbr.rel (%p326) target = $region69
    $region68: #{tpu_custom_call.1} parent=1 // pred_region
      %v329 = vld [vmem:[#allocation2] sm:$0xff]
      %v330 = vld [vmem:[#allocation10] sm:$0xff]
      %v331 = vld [vmem:[#allocation10 + $0x8] sm:$0xff]
      %v332 = vld [vmem:[#allocation10 + $0x10] sm:$0xff]
      %v333 = vld [vmem:[#allocation10 + $0x18] sm:$0xff]
      %v334 = vld [vmem:[#allocation3] sm:$0xff]
      %v335 = vld [vmem:[#allocation11] sm:$0xff]
      %v336 = vld [vmem:[#allocation11 + $0x8] sm:$0xff]
      %v337 = vld [vmem:[#allocation11 + $0x10] sm:$0xff]
      %v338 = vld [vmem:[#allocation11 + $0x18] sm:$0xff]
      %v340 = vsel %vm111, %v334, 0
      %342 = vmatprep.subr.mxu0 0.0
      %343 = vmatpush1.msra.mxu0 %v335
      %344 = vmatprep.subr.mxu0 0.0
      %345 = vmatpush1.msra.mxu0 %v336
      %346 = vmatprep.subr.mxu0 0.0
      %347 = vmatpush1.msra.mxu0 %v337
      %348 = vmatprep.subr.mxu0 0.0
      %349 = vmatpush1.msra.mxu0 %v338
      %350 = vmatprep.subr.mxu0 0.0
      %351 = vmatpush1.msra.mxu0 0.0
      %352 = vmatprep.subr.mxu0 0.0
      %353 = vmatpush1.msra.mxu0 0.0
      %354 = vmatprep.subr.mxu0 0.0
      %355 = vmatpush1.msra.mxu0 0.0
      %356 = vmatprep.subr.mxu0 0.0
      %357 = vmatpush1.msra.mxu0 0.0
      %358 = vmatprep.subr.mxu0 0.0
      %359 = vmatpush1.msra.mxu0 0.0
      %360 = vmatprep.subr.mxu0 0.0
      %361 = vmatpush1.msra.mxu0 0.0
      %362 = vmatprep.subr.mxu0 0.0
      %363 = vmatpush1.msra.mxu0 0.0
      %364 = vmatprep.subr.mxu0 0.0
      %365 = vmatpush1.msra.mxu0 0.0
      %366 = vmatprep.subr.mxu0 0.0
      %367 = vmatpush1.msra.mxu0 0.0
      %368 = vmatprep.subr.mxu0 0.0
      %369 = vmatpush1.msra.mxu0 0.0
      %370 = vmatprep.subr.mxu0 0.0
      %371 = vmatpush1.msra.mxu0 0.0
      %372 = vmatprep.subr.mxu0 0.0
      %373 = vmatpush1.msra.mxu0 0.0
      %374 = vmatprep.subr.mxu0 0.0
      %375 = vmatpush1.msra.mxu0 0.0
      %376 = vmatprep.subr.mxu0 0.0
      %377 = vmatpush1.msra.mxu0 0.0
      %378 = vmatprep.subr.mxu0 0.0
      %379 = vmatpush1.msra.mxu0 0.0
      %380 = vmatprep.subr.mxu0 0.0
      %381 = vmatpush1.msra.mxu0 0.0
      %382 = vmatprep.subr.mxu0 0.0
      %383 = vmatpush1.msra.mxu0 0.0
      %384 = vmatprep.subr.mxu0 0.0
      %385 = vmatpush1.msra.mxu0 0.0
      %386 = vmatprep.subr.mxu0 0.0
      %387 = vmatpush1.msra.mxu0 0.0
      %388 = vmatprep.subr.mxu0 0.0
      %389 = vmatpush1.msra.mxu0 0.0
      %390 = vmatprep.subr.mxu0 0.0
      %391 = vmatpush1.msra.mxu0 0.0
      %392 = vmatprep.subr.mxu0 0.0
      %393 = vmatpush1.msra.mxu0 0.0
      %394 = vmatprep.subr.mxu0 0.0
      %395 = vmatpush1.msra.mxu0 0.0
      %396 = vmatprep.subr.mxu0 0.0
      %397 = vmatpush1.msra.mxu0 0.0
      %398 = vmatprep.subr.mxu0 0.0
      %399 = vmatpush1.msra.mxu0 0.0
      %400 = vmatprep.subr.mxu0 0.0
      %401 = vmatpush1.msra.mxu0 0.0
      %402 = vmatprep.subr.mxu0 0.0
      %403 = vmatpush1.msra.mxu0 0.0
      %404 = vmatprep.subr.mxu0 0.0
      %405 = vmatpush1.msra.mxu0 0.0
      %406 = vmatprep.mubr.f32.mxu0 0.0
      %407 = vmatmul.mubr.f32.gmra.mrb[0].mxu0 %v340
      %v408 = vpop.f32.mrb[0].mxu0
      %v409 = vadd.f32 0.0, %v408
      %v410 = vpop.f32.mrb[0].mxu0
      %411 = vdwg.mxu0
      %v413 = vsel %vm111, %v329, 0
      %415 = vmatprep.subr.mxu0 0.0
      %416 = vmatpush1.msra.mxu0 %v330
      %417 = vmatprep.subr.mxu0 0.0
      %418 = vmatpush1.msra.mxu0 %v331
      %419 = vmatprep.subr.mxu0 0.0
      %420 = vmatpush1.msra.mxu0 %v332
      %421 = vmatprep.subr.mxu0 0.0
      %422 = vmatpush1.msra.mxu0 %v333
      %423 = vmatprep.subr.mxu0 0.0
      %424 = vmatpush1.msra.mxu0 0.0
      %425 = vmatprep.subr.mxu0 0.0
      %426 = vmatpush1.msra.mxu0 0.0
      %427 = vmatprep.subr.mxu0 0.0
      %428 = vmatpush1.msra.mxu0 0.0
      %429 = vmatprep.subr.mxu0 0.0
      %430 = vmatpush1.msra.mxu0 0.0
      %431 = vmatprep.subr.mxu0 0.0
      %432 = vmatpush1.msra.mxu0 0.0
      %433 = vmatprep.subr.mxu0 0.0
      %434 = vmatpush1.msra.mxu0 0.0
      %435 = vmatprep.subr.mxu0 0.0
      %436 = vmatpush1.msra.mxu0 0.0
      %437 = vmatprep.subr.mxu0 0.0
      %438 = vmatpush1.msra.mxu0 0.0
      %439 = vmatprep.subr.mxu0 0.0
      %440 = vmatpush1.msra.mxu0 0.0
      %441 = vmatprep.subr.mxu0 0.0
      %442 = vmatpush1.msra.mxu0 0.0
      %443 = vmatprep.subr.mxu0 0.0
      %444 = vmatpush1.msra.mxu0 0.0
      %445 = vmatprep.subr.mxu0 0.0
      %446 = vmatpush1.msra.mxu0 0.0
      %447 = vmatprep.subr.mxu0 0.0
      %448 = vmatpush1.msra.mxu0 0.0
      %449 = vmatprep.subr.mxu0 0.0
      %450 = vmatpush1.msra.mxu0 0.0
      %451 = vmatprep.subr.mxu0 0.0
      %452 = vmatpush1.msra.mxu0 0.0
      %453 = vmatprep.subr.mxu0 0.0
      %454 = vmatpush1.msra.mxu0 0.0
      %455 = vmatprep.subr.mxu0 0.0
      %456 = vmatpush1.msra.mxu0 0.0
      %457 = vmatprep.subr.mxu0 0.0
      %458 = vmatpush1.msra.mxu0 0.0
      %459 = vmatprep.subr.mxu0 0.0
      %460 = vmatpush1.msra.mxu0 0.0
      %461 = vmatprep.subr.mxu0 0.0
      %462 = vmatpush1.msra.mxu0 0.0
      %463 = vmatprep.subr.mxu0 0.0
      %464 = vmatpush1.msra.mxu0 0.0
      %465 = vmatprep.subr.mxu0 0.0
      %466 = vmatpush1.msra.mxu0 0.0
      %467 = vmatprep.subr.mxu0 0.0
      %468 = vmatpush1.msra.mxu0 0.0
      %469 = vmatprep.subr.mxu0 0.0
      %470 = vmatpush1.msra.mxu0 0.0
      %471 = vmatprep.subr.mxu0 0.0
      %472 = vmatpush1.msra.mxu0 0.0
      %473 = vmatprep.subr.mxu0 0.0
      %474 = vmatpush1.msra.mxu0 0.0
      %475 = vmatprep.subr.mxu0 0.0
      %476 = vmatpush1.msra.mxu0 0.0
      %477 = vmatprep.subr.mxu0 0.0
      %478 = vmatpush1.msra.mxu0 0.0
      %479 = vmatprep.mubr.f32.mxu0 0.0
      %480 = vmatmul.mubr.f32.gmra.mrb[0].mxu0 %v413
      %v481 = vpop.f32.mrb[0].mxu0
      %v482 = vadd.f32 %v409, %v481
      %v483 = vpop.f32.mrb[0].mxu0
      %484 = vdwg.mxu0
      %v485 = vld [vmem:[%s4] sm:$0x1]
      %v487 = vlaneseq
      %v488 = vshrl.u32 %v487, 7
      %v489 = vsub.s32 0, %v488
      %v490 = vrot.slane %v485, %v489
      %v492 = vadd.f32 %v482, %v490
      %v493 = vmax.f32 %v492, 0.0
      %v494 = vld [vmem:[#allocation13] sm:$0xff]
      %v495 = vld [vmem:[#allocation13 + $0x8] sm:$0xff]
      %v496 = vld [vmem:[#allocation13 + $0x10] sm:$0xff]
      %v497 = vld [vmem:[#allocation13 + $0x18] sm:$0xff]
      %v498 = vld [vmem:[#allocation13 + $0x20] sm:$0xff]
      %v499 = vld [vmem:[#allocation13 + $0x28] sm:$0xff]
      %v500 = vld [vmem:[#allocation13 + $0x30] sm:$0xff]
      %v501 = vld [vmem:[#allocation13 + $0x38] sm:$0xff]
      %v502 = vld [vmem:[#allocation13 + $0x40] sm:$0xff]
      %v503 = vld [vmem:[#allocation13 + $0x48] sm:$0xff]
      %v504 = vld [vmem:[#allocation13 + $0x50] sm:$0xff]
      %v505 = vld [vmem:[#allocation13 + $0x58] sm:$0xff]
      %v506 = vld [vmem:[#allocation13 + $0x60] sm:$0xff]
      %v507 = vld [vmem:[#allocation13 + $0x68] sm:$0xff]
      %v508 = vld [vmem:[#allocation13 + $0x70] sm:$0xff]
      %v509 = vld [vmem:[#allocation13 + $0x78] sm:$0xff]
      %v510 = vld [vmem:[%s6] sm:$0x1]
      %v512 = vlaneseq
      %v513 = vshrl.u32 %v512, 7
      %v514 = vsub.s32 0, %v513
      %v515 = vrot.slane %v510, %v514
      %517 = vmatprep.subr.mxu0 0.0
      %518 = vmatpush1.msra.mxu0 %v494
      %519 = vmatprep.subr.mxu0 0.0
      %520 = vmatpush1.msra.mxu0 %v495
      %521 = vmatprep.subr.mxu0 0.0
      %522 = vmatpush1.msra.mxu0 %v496
      %523 = vmatprep.subr.mxu0 0.0
      %524 = vmatpush1.msra.mxu0 %v497
      %525 = vmatprep.subr.mxu0 0.0
      %526 = vmatpush1.msra.mxu0 %v498
      %527 = vmatprep.subr.mxu0 0.0
      %528 = vmatpush1.msra.mxu0 %v499
      %529 = vmatprep.subr.mxu0 0.0
      %530 = vmatpush1.msra.mxu0 %v500
      %531 = vmatprep.subr.mxu0 0.0
      %532 = vmatpush1.msra.mxu0 %v501
      %533 = vmatprep.subr.mxu0 0.0
      %534 = vmatpush1.msra.mxu0 %v502
      %535 = vmatprep.subr.mxu0 0.0
      %536 = vmatpush1.msra.mxu0 %v503
      %537 = vmatprep.subr.mxu0 0.0
      %538 = vmatpush1.msra.mxu0 %v504
      %539 = vmatprep.subr.mxu0 0.0
      %540 = vmatpush1.msra.mxu0 %v505
      %541 = vmatprep.subr.mxu0 0.0
      %542 = vmatpush1.msra.mxu0 %v506
      %543 = vmatprep.subr.mxu0 0.0
      %544 = vmatpush1.msra.mxu0 %v507
      %545 = vmatprep.subr.mxu0 0.0
      %546 = vmatpush1.msra.mxu0 %v508
      %547 = vmatprep.subr.mxu0 0.0
      %548 = vmatpush1.msra.mxu0 %v509
      %549 = vmatprep.subr.mxu0 0.0
      %550 = vmatpush1.msra.mxu0 0.0
      %551 = vmatprep.subr.mxu0 0.0
      %552 = vmatpush1.msra.mxu0 0.0
      %553 = vmatprep.subr.mxu0 0.0
      %554 = vmatpush1.msra.mxu0 0.0
      %555 = vmatprep.subr.mxu0 0.0
      %556 = vmatpush1.msra.mxu0 0.0
      %557 = vmatprep.subr.mxu0 0.0
      %558 = vmatpush1.msra.mxu0 0.0
      %559 = vmatprep.subr.mxu0 0.0
      %560 = vmatpush1.msra.mxu0 0.0
      %561 = vmatprep.subr.mxu0 0.0
      %562 = vmatpush1.msra.mxu0 0.0
      %563 = vmatprep.subr.mxu0 0.0
      %564 = vmatpush1.msra.mxu0 0.0
      %565 = vmatprep.subr.mxu0 0.0
      %566 = vmatpush1.msra.mxu0 0.0
      %567 = vmatprep.subr.mxu0 0.0
      %568 = vmatpush1.msra.mxu0 0.0
      %569 = vmatprep.subr.mxu0 0.0
      %570 = vmatpush1.msra.mxu0 0.0
      %571 = vmatprep.subr.mxu0 0.0
      %572 = vmatpush1.msra.mxu0 0.0
      %573 = vmatprep.subr.mxu0 0.0
      %574 = vmatpush1.msra.mxu0 0.0
      %575 = vmatprep.subr.mxu0 0.0
      %576 = vmatpush1.msra.mxu0 0.0
      %577 = vmatprep.subr.mxu0 0.0
      %578 = vmatpush1.msra.mxu0 0.0
      %579 = vmatprep.subr.mxu0 0.0
      %580 = vmatpush1.msra.mxu0 0.0
      %581 = vmatprep.mubr.f32.mxu0 0.0
      %582 = vmatmul.mubr.f32.gmra.mrb[0].mxu0 %v493
      %v583 = vpop.f32.mrb[0].mxu0
      %v584 = vadd.f32 %v515, %v583
      %v585 = vpop.f32.mrb[0].mxu0
      %586 = vdwg.mxu0
      %v587 = vmax.f32 %v584, 0.0
      %v588 = vld [vmem:[%s7] sm:$0x1]
      %v590 = vlaneseq
      %v591 = vshrl.u32 %v590, 7
      %v592 = vsub.s32 0, %v591
      %v593 = vrot.slane %v588, %v592
      %v595 = vmul.f32 %v587, %v593
      %596 = vadd.xlane.f32.xlu0 %v595
      %v597 = vpop.xlane.xlu0 %596
      %v598 = vld [vmem:[#allocation4] sm:$0x1]
      %v600 = vlaneseq
      %v601 = vshrl.u32 %v600, 7
      %v602 = vsub.s32 0, %v601
      %v603 = vrot.slane %v598, %v602
      %v605 = vadd.f32 %v597, %v603
      %v606 = vxor.u32 %v605, 2147483648
      %v607 = vmul.f32 %v606, 1.442695
      %v608 = vpow.pop %v607
      %v609 = vadd.f32 %v608, 1.0
      %v610 = vrcp.pop %v609
      %v611 = vmul.f32 1.0, %v610
      %613 = vset.pattern.permute.xlu0 0
      %614 = vperm.xlu0 %613, %v611
      %v615 = vpop.permute.xlu0 %614
      %617 = vst [vmem:[#allocation14] sm:$0xff] %v615
    $region69: #{tpu_custom_call.1} parent=1 // pred_fallthru
      _
    // Predicated region
    $region70: #{tpu_custom_call.1} parent=1 // pred_check
      _
    $region71: #{tpu_custom_call.1} parent=1 // pred_check_branch
      %619 = sbr.rel (0) target = $region73
    $region72: #{tpu_custom_call.1} parent=1 // pred_region
      %s621 = ssub.s32 128, 128
      %622 = vsyncadd [#allocation7], %s621
      %s624 = sshll.u32 [#allocation14], 4
      %s625 = int_to_ptr.vmem [resolvable:$true] %s624
      %627 = dma.vmem_to_hbm [thread:$0]  %s625, 128, %s9, [#allocation7]
    $region73: #{tpu_custom_call.1} parent=1 // pred_fallthru
      _
    // Predicated region
    $region74: #{tpu_custom_call.1} parent=1 // pred_check
      _
    $region75: #{tpu_custom_call.1} parent=1 // pred_check_branch
      %629 = sbr.rel (0) target = $region77
    $region76: #{tpu_custom_call.1} parent=1 // pred_region
      %630 = dma.done [#allocation7], 128
    $region77: #{tpu_custom_call.1} parent=1 // pred_fallthru
      _
    %631 = vsyncpa [#allocation6], 1
    %632 = vsyncpa [#allocation9], 1
    %633 = vsyncpa [#allocation12], 1
    %634 = vsyncpa [#allocation7], 1

</llo_original>
